<compile_context>
chip_gen: v5e
topology: v5e:2x2
jax: 0.10.0
libtpu: 0.0.40
codegen_flags: <defaults>
</compile_context>

<pallas_src>
import jax
import jax.numpy as jnp
from jax import lax
from jax.experimental import pallas as pl
from jax.experimental.pallas import tpu as pltpu


OUT_PAD = 128  # lane-dense output store; real logits live in the first 5 lanes


def deep_cbow_kernel(ids_ref, embw1_ref, b1_ref, w2_ref, b2_ref,
                     w3_ref, b3_ref, o_ref):
    Bblk, T = ids_ref.shape
    V = embw1_ref.shape[0]
    out_pad = o_ref.shape[1]
    M = Bblk * T

    # ---- fused embedding gather + layer 1: onehot @ (emb @ w1) on the MXU ---
    ids = ids_ref[...]                                              # (Bblk, T)
    vocab_iota = lax.broadcasted_iota(jnp.int32, (Bblk, T, V), 2)   # (Bblk,T,V)
    onehot = jnp.where(ids[:, :, None] == vocab_iota, 1.0, 0.0)     # f32
    # T == 8 sublanes at f32 -> collapsing the leading dims is layout-trivial.
    onehot = onehot.reshape(M, V).astype(jnp.bfloat16)              # (M, V)

    h = jnp.tanh(jnp.dot(onehot, embw1_ref[...],
                         preferred_element_type=jnp.float32) + b1_ref[...])
    h = jnp.tanh(jnp.dot(h.astype(jnp.bfloat16), w2_ref[...],
                         preferred_element_type=jnp.float32) + b2_ref[...])
    h = jnp.tanh(jnp.dot(h.astype(jnp.bfloat16), w3_ref[...],
                         preferred_element_type=jnp.float32) + b3_ref[...])
    # h: (M, out_pad) f32; padded columns are tanh(0) = 0 (sliced off outside).

    # ---- bag-of-words sum over the sequence axis (cheap sublane reduction) --
    o_ref[...] = h.reshape(Bblk, T, out_pad).sum(axis=1)            # (Bblk, 128)


def _round_up(x, m):
    return ((x + m - 1) // m) * m


def prepare_params(embedding, w1, b1, w2, b2, w3, b3):
    """One-time weight prep, hoisted out of the per-call hot path."""
    V, E = embedding.shape
    H = w1.shape[1]
    OUT = w3.shape[1]
    # Fold l1 into the gather: onehot @ (emb @ w1) == (onehot @ emb) @ w1.
    emb_w1 = jnp.dot(embedding.astype(jnp.float32),
                     w1.astype(jnp.float32)).astype(jnp.bfloat16)   # (V, H)
    w3_pad = jnp.zeros((H, OUT_PAD), jnp.bfloat16).at[:, :OUT].set(
        w3.astype(jnp.bfloat16))
    b3_pad = jnp.zeros((1, OUT_PAD), jnp.float32).at[:, :OUT].set(
        b3.astype(jnp.float32))
    return {
        "emb_w1": emb_w1,
        "b1": b1.astype(jnp.float32),
        "w2": w2.astype(jnp.bfloat16),
        "b2": b2.astype(jnp.float32),
        "w3": w3_pad,
        "b3": b3_pad,
        "out_size": OUT,
    }


def deep_cbow_forward(token_ids, params):
    """token_ids: (B, T) int. Returns logits (B, OUT) float32."""
    B, T = token_ids.shape
    V, H = params["emb_w1"].shape
    OUT = params["out_size"]

    # Batch tile: large (amortize ~0.35us/step pipeline overhead, bigger MXU M
    # dim), but capped so big batches still produce >= 2 grid steps (v7x has
    # two TensorCores; a 1-step grid leaves one idle).
    Bblk = min(512, _round_up(B, 8))
    if Bblk >= 16 and pl.cdiv(B, Bblk) < 2:
        Bblk = max(8, _round_up(pl.cdiv(B, 2), 8))
    B_pad = pl.cdiv(B, Bblk) * Bblk

    # Clamp ids (jnp.take-style) so an out-of-range id can't silently become an
    # all-zero one-hot row; pad batch rows with token 0 (sliced off later).
    ids = jnp.clip(token_ids.astype(jnp.int32), 0, V - 1)
    if B_pad != B:
        ids = jnp.pad(ids, ((0, B_pad - B), (0, 0)))

    grid = (B_pad // Bblk,)

    # NOTE: the one-hot MXU gather is right for small vocabularies like this
    # demo; for Bblk*T*V one-hots beyond a few MiB (budget against v7x's
    # 64 MiB VMEM) switch to a scalar-prefetch / DMA row-gather instead.
    out = pl.pallas_call(
        deep_cbow_kernel,
        out_shape=jax.ShapeDtypeStruct((B_pad, OUT_PAD), jnp.float32),
        grid_spec=pltpu.PrefetchScalarGridSpec(
            num_scalar_prefetch=0,
            grid=grid,
            in_specs=[
                pl.BlockSpec((Bblk, T), lambda i: (i, 0)),        # token ids
                pl.BlockSpec((V, H), lambda i: (0, 0)),           # emb @ w1
                pl.BlockSpec((1, H), lambda i: (0, 0)),           # b1
                pl.BlockSpec((H, H), lambda i: (0, 0)),           # w2
                pl.BlockSpec((1, H), lambda i: (0, 0)),           # b2
                pl.BlockSpec((H, OUT_PAD), lambda i: (0, 0)),     # w3 (padded)
                pl.BlockSpec((1, OUT_PAD), lambda i: (0, 0)),     # b3 (padded)
            ],
            out_specs=pl.BlockSpec((Bblk, OUT_PAD), lambda i: (i, 0)),
        ),
        compiler_params=pltpu.CompilerParams(
            dimension_semantics=("parallel",),
            # Footprint is tiny now; explicit limit keeps larger Bblk / vocab
            # portable (v5e scoped default is 16 MiB).
            vmem_limit_bytes=32 * 1024 * 1024,
        ),
    )(ids, params["emb_w1"], params["b1"], params["w2"], params["b2"],
      params["w3"], params["b3"])

    # TODO(synk): for very large B, emit the logits transposed (OUT on
    # sublanes, batch on lanes) or in bf16 to shrink the 128/5-padded writeback.
    return out[:B, :OUT]


def reference_forward(token_ids, embedding, w1, b1, w2, b2, w3, b3):
    x = jnp.take(embedding, token_ids, axis=0).astype(jnp.float32)
    x = jnp.tanh(x @ w1 + b1)
    x = jnp.tanh(x @ w2 + b2)
    x = jnp.tanh(x @ w3 + b3)
    return jnp.sum(x, axis=1)


if __name__ == "__main__":
    # Small, deterministic synthetic setup consistent with the module.
    VOCAB_SIZE = 100
    EMBED_DIM = 32
    HIDDEN_DIM = 32
    OUT_SIZE = 5
    B, T = 2, 8

    key = jax.random.PRNGKey(0)
    k_emb, k_w1, k_b1, k_w2, k_b2, k_w3, k_b3, k_tok = jax.random.split(key, 8)

    embedding = jax.random.normal(k_emb, (VOCAB_SIZE, EMBED_DIM), jnp.float32)
    # Linear weights stored as (in, out) (i.e. PyTorch W^T), biases as (1, out).
    w1 = jax.random.normal(k_w1, (EMBED_DIM, HIDDEN_DIM), jnp.float32) * 0.1
    b1 = jax.random.normal(k_b1, (1, HIDDEN_DIM), jnp.float32) * 0.1
    w2 = jax.random.normal(k_w2, (HIDDEN_DIM, HIDDEN_DIM), jnp.float32) * 0.1
    b2 = jax.random.normal(k_b2, (1, HIDDEN_DIM), jnp.float32) * 0.1
    w3 = jax.random.normal(k_w3, (HIDDEN_DIM, OUT_SIZE), jnp.float32) * 0.1
    b3 = jax.random.normal(k_b3, (1, OUT_SIZE), jnp.float32) * 0.1

    token_ids = jax.random.randint(k_tok, (B, T), 0, VOCAB_SIZE, jnp.int32)

    # One-time prep (bf16 casts, emb@w1 fold, l3 padding) -- hot path is just
    # the pallas_call in deep_cbow_forward.
    params = jax.tree_util.tree_map(jax.block_until_ready,
                                    prepare_params(embedding, w1, b1,
                                                   w2, b2, w3, b3))

    logits = deep_cbow_forward(token_ids, params)
    logits = jax.block_until_ready(logits)

    ref = reference_forward(token_ids, embedding, w1, b1, w2, b2, w3, b3)
    ref = jax.block_until_ready(ref)

    assert logits.shape == (B, OUT_SIZE)
    # bf16 matmul operands (f32 accumulate) -> loosened tolerance vs f32 ref.
    assert jnp.allclose(logits, ref, atol=5e-2, rtol=5e-2), (logits, ref)

    print("KERNEL_OK")
</pallas_src>

<mosaic_0001>
module attributes {stable_mosaic.version = 11 : i64} {
  func.func @deep_cbow_kernel(%arg0: i32, %arg1: memref<8x8xi32, #tpu.memory_space<vmem>>, %arg2: memref<100x32xbf16, #tpu.memory_space<vmem>>, %arg3: memref<1x32xf32, #tpu.memory_space<vmem>>, %arg4: memref<32x32xbf16, #tpu.memory_space<vmem>>, %arg5: memref<1x32xf32, #tpu.memory_space<vmem>>, %arg6: memref<32x128xbf16, #tpu.memory_space<vmem>>, %arg7: memref<1x128xf32, #tpu.memory_space<vmem>>, %arg8: memref<8x128xf32, #tpu.memory_space<vmem>>) attributes {dimension_semantics = [#tpu.dimension_semantics<parallel>], iteration_bounds = array<i64: 1>, scalar_prefetch = 0 : i64, scratch_operands = 0 : i64, tpu.core_type = #tpu.core_type<tc>, window_params = [{transform_indices = @transform_0, window_bounds = array<i64: 8, 8>}, {pipeline_mode = #tpu.pipeline_mode<synchronous>, transform_indices = @transform_1, window_bounds = array<i64: 100, 32>}, {pipeline_mode = #tpu.pipeline_mode<synchronous>, transform_indices = @transform_2, window_bounds = array<i64: 1, 32>}, {pipeline_mode = #tpu.pipeline_mode<synchronous>, transform_indices = @transform_3, window_bounds = array<i64: 32, 32>}, {pipeline_mode = #tpu.pipeline_mode<synchronous>, transform_indices = @transform_4, window_bounds = array<i64: 1, 32>}, {pipeline_mode = #tpu.pipeline_mode<synchronous>, transform_indices = @transform_5, window_bounds = array<i64: 32, 128>}, {pipeline_mode = #tpu.pipeline_mode<synchronous>, transform_indices = @transform_6, window_bounds = array<i64: 1, 128>}, {transform_indices = @transform_7, window_bounds = array<i64: 8, 128>}]} {
    %c0 = arith.constant 0 : index
    %c0_0 = arith.constant 0 : index
    %0 = vector.load %arg1[%c0, %c0_0] : memref<8x8xi32, #tpu.memory_space<vmem>>, vector<8x8xi32>
    %1 = tpu.iota {dimensions = array<i32: 2>} : vector<8x8x100xi32>
    %2 = vector.shape_cast %0 : vector<8x8xi32> to vector<8x8x1xi32>
    %3 = vector.broadcast %2 : vector<8x8x1xi32> to vector<8x8x100xi32>
    %4 = arith.cmpi eq, %3, %1 : vector<8x8x100xi32>
    %cst = arith.constant 1.000000e+00 : f32
    %cst_1 = arith.constant 0.000000e+00 : f32
    %5 = vector.broadcast %cst : f32 to vector<8x8x100xf32>
    %6 = vector.broadcast %cst_1 : f32 to vector<8x8x100xf32>
    %7 = arith.select %4, %5, %6 : vector<8x8x100xi1>, vector<8x8x100xf32>
    %8 = vector.shape_cast %7 : vector<8x8x100xf32> to vector<64x100xf32>
    %9 = arith.truncf %8 : vector<64x100xf32> to vector<64x100xbf16>
    %c0_2 = arith.constant 0 : index
    %c0_3 = arith.constant 0 : index
    %10 = vector.load %arg2[%c0_2, %c0_3] : memref<100x32xbf16, #tpu.memory_space<vmem>>, vector<100x32xbf16>
    %cst_4 = arith.constant dense<0.000000e+00> : vector<64x32xf32>
    %11 = tpu.matmul %9, %10, %cst_4 {dimension_numbers = #tpu.dot_dimension_numbers<[1], [0], [0], [1], [0, 0, 1, 1], [], []>} : vector<64x100xbf16>, vector<100x32xbf16>, vector<64x32xf32> -> vector<64x32xf32>
    %c0_5 = arith.constant 0 : index
    %c0_6 = arith.constant 0 : index
    %12 = vector.load %arg3[%c0_5, %c0_6] : memref<1x32xf32, #tpu.memory_space<vmem>>, vector<1x32xf32>
    %13 = vector.broadcast %12 : vector<1x32xf32> to vector<64x32xf32>
    %14 = arith.addf %11, %13 : vector<64x32xf32>
    %15 = math.tanh %14 : vector<64x32xf32>
    %16 = arith.truncf %15 : vector<64x32xf32> to vector<64x32xbf16>
    %c0_7 = arith.constant 0 : index
    %c0_8 = arith.constant 0 : index
    %17 = vector.load %arg4[%c0_7, %c0_8] : memref<32x32xbf16, #tpu.memory_space<vmem>>, vector<32x32xbf16>
    %cst_9 = arith.constant dense<0.000000e+00> : vector<64x32xf32>
    %18 = tpu.matmul %16, %17, %cst_9 {dimension_numbers = #tpu.dot_dimension_numbers<[1], [0], [0], [1], [0, 0, 1, 1], [], []>} : vector<64x32xbf16>, vector<32x32xbf16>, vector<64x32xf32> -> vector<64x32xf32>
    %c0_10 = arith.constant 0 : index
    %c0_11 = arith.constant 0 : index
    %19 = vector.load %arg5[%c0_10, %c0_11] : memref<1x32xf32, #tpu.memory_space<vmem>>, vector<1x32xf32>
    %20 = vector.broadcast %19 : vector<1x32xf32> to vector<64x32xf32>
    %21 = arith.addf %18, %20 : vector<64x32xf32>
    %22 = math.tanh %21 : vector<64x32xf32>
    %23 = arith.truncf %22 : vector<64x32xf32> to vector<64x32xbf16>
    %c0_12 = arith.constant 0 : index
    %c0_13 = arith.constant 0 : index
    %24 = vector.load %arg6[%c0_12, %c0_13] : memref<32x128xbf16, #tpu.memory_space<vmem>>, vector<32x128xbf16>
    %cst_14 = arith.constant dense<0.000000e+00> : vector<64x128xf32>
    %25 = tpu.matmul %23, %24, %cst_14 {dimension_numbers = #tpu.dot_dimension_numbers<[1], [0], [0], [1], [0, 0, 1, 1], [], []>} : vector<64x32xbf16>, vector<32x128xbf16>, vector<64x128xf32> -> vector<64x128xf32>
    %c0_15 = arith.constant 0 : index
    %c0_16 = arith.constant 0 : index
    %26 = vector.load %arg7[%c0_15, %c0_16] : memref<1x128xf32, #tpu.memory_space<vmem>>, vector<1x128xf32>
    %27 = vector.broadcast %26 : vector<1x128xf32> to vector<64x128xf32>
    %28 = arith.addf %25, %27 : vector<64x128xf32>
    %29 = math.tanh %28 : vector<64x128xf32>
    %30 = vector.shape_cast %29 : vector<64x128xf32> to vector<8x8x128xf32>
    %cst_17 = arith.constant dense<0.000000e+00> : vector<8x128xf32>
    %31 = vector.multi_reduction <add>, %30, %cst_17 [1] : vector<8x8x128xf32> to vector<8x128xf32>
    %c0_18 = arith.constant 0 : index
    %c0_19 = arith.constant 0 : index
    %32 = vector.load %arg8[%c0_18, %c0_19] : memref<8x128xf32, #tpu.memory_space<vmem>>, vector<8x128xf32>
    tpu.vector_store %arg8[%c0_18, %c0_19], %31 {strides = array<i32>} : memref<8x128xf32, #tpu.memory_space<vmem>>, vector<8x128xf32>,
    return
  }
  func.func @transform_0(%arg0: i32) -> (i32, i32) {
    %c0_i32 = arith.constant 0 : i32
    %c0_i32_0 = arith.constant 0 : i32
    return %arg0, %c0_i32 : i32, i32
  }
  func.func @transform_1(%arg0: i32) -> (i32, i32) {
    %c0_i32 = arith.constant 0 : i32
    %c0_i32_0 = arith.constant 0 : i32
    %c0_i32_1 = arith.constant 0 : i32
    return %c0_i32, %c0_i32_0 : i32, i32
  }
  func.func @transform_2(%arg0: i32) -> (i32, i32) {
    %c0_i32 = arith.constant 0 : i32
    %c0_i32_0 = arith.constant 0 : i32
    %c0_i32_1 = arith.constant 0 : i32
    return %c0_i32, %c0_i32_0 : i32, i32
  }
  func.func @transform_3(%arg0: i32) -> (i32, i32) {
    %c0_i32 = arith.constant 0 : i32
    %c0_i32_0 = arith.constant 0 : i32
    %c0_i32_1 = arith.constant 0 : i32
    return %c0_i32, %c0_i32_0 : i32, i32
  }
  func.func @transform_4(%arg0: i32) -> (i32, i32) {
    %c0_i32 = arith.constant 0 : i32
    %c0_i32_0 = arith.constant 0 : i32
    %c0_i32_1 = arith.constant 0 : i32
    return %c0_i32, %c0_i32_0 : i32, i32
  }
  func.func @transform_5(%arg0: i32) -> (i32, i32) {
    %c0_i32 = arith.constant 0 : i32
    %c0_i32_0 = arith.constant 0 : i32
    %c0_i32_1 = arith.constant 0 : i32
    return %c0_i32, %c0_i32_0 : i32, i32
  }
  func.func @transform_6(%arg0: i32) -> (i32, i32) {
    %c0_i32 = arith.constant 0 : i32
    %c0_i32_0 = arith.constant 0 : i32
    %c0_i32_1 = arith.constant 0 : i32
    return %c0_i32, %c0_i32_0 : i32, i32
  }
  func.func @transform_7(%arg0: i32) -> (i32, i32) {
    %c0_i32 = arith.constant 0 : i32
    %c0_i32_0 = arith.constant 0 : i32
    return %arg0, %c0_i32 : i32, i32
  }
}

</mosaic_0001>

<llo_original>
// kernel: tpu_custom_call.1
$region0: #{tpu_custom_call.1}
  #allocation0 [shape = 'u32[]', space=smem, size = 0x4, offset = 0x4, fixed_abs, tag = 'smem constant byte address 0x4 - core index']
  #allocation1 [shape = 'u32[72,128]{1,0:T(1,128)}', space=vmem, size = 0x9000, scoped, tag = 'internal scratch']
  %s0 = inlined_call_operand.vmem [shape: s32[8,8], index: 0, kind: input, shape index: {}]
  %s1 = inlined_call_operand.vmem [shape: bf16[100,32], index: 1, kind: input, shape index: {}]
  %s2 = inlined_call_operand.vmem [shape: f32[1,32], index: 2, kind: input, shape index: {}]
  %s3 = inlined_call_operand.vmem [shape: bf16[32,32], index: 3, kind: input, shape index: {}]
  %s4 = inlined_call_operand.vmem [shape: f32[1,32], index: 4, kind: input, shape index: {}]
  %s5 = inlined_call_operand.vmem [shape: bf16[32,128], index: 5, kind: input, shape index: {}]
  %s6 = inlined_call_operand.vmem [shape: f32[1,128], index: 6, kind: input, shape index: {}]
  %s7 = inlined_call_operand.hbm [shape: f32[8,128], index: 7, kind: output, shape index: {}]
  %s8 = sld [smem:[#allocation0]]
  $region38: #{tpu_custom_call.1} parent=0
    _
  %s10 = ssub.s32 1, %s8
  %s11 = scalar_select 0, %s10, %s8
  $region1: #{tpu_custom_call.1} parent=0
    #allocation2 [shape = 'u8[4096]{0}', space=vmem, size = 0x1000, scoped, tag = 'output window, operand 0, single buffered']
    #allocation3 [shape = 's32[1]{0}', space=sflag, size = 0x4, scoped, tag = 'scoped memory for tpu_custom_call.1']
    %12 = vsyncpa [#allocation3], 0
    // Predicated region
    $region2: #{tpu_custom_call.1} parent=1 // pred_check
      _
    $region3: #{tpu_custom_call.1} parent=1 // pred_check_branch
      %14 = sbr.rel (0) target = $region5
    $region4: #{tpu_custom_call.1} parent=1 // pred_region
      _
    $region5: #{tpu_custom_call.1} parent=1 // pred_fallthru
      _
    // Predicated region
    $region6: #{tpu_custom_call.1} parent=1 // pred_check
      _
    $region7: #{tpu_custom_call.1} parent=1 // pred_check_branch
      %16 = sbr.rel (0) target = $region9
    $region8: #{tpu_custom_call.1} parent=1 // pred_region
      _
    $region9: #{tpu_custom_call.1} parent=1 // pred_fallthru
      _
    // Predicated region
    $region10: #{tpu_custom_call.1} parent=1 // pred_check
      _
    $region11: #{tpu_custom_call.1} parent=1 // pred_check_branch
      %18 = sbr.rel (0) target = $region13
    $region12: #{tpu_custom_call.1} parent=1 // pred_region
      _
    $region13: #{tpu_custom_call.1} parent=1 // pred_fallthru
      _
    // Predicated region
    $region14: #{tpu_custom_call.1} parent=1 // pred_check
      _
    $region15: #{tpu_custom_call.1} parent=1 // pred_check_branch
      %20 = sbr.rel (0) target = $region17
    $region16: #{tpu_custom_call.1} parent=1 // pred_region
      _
    $region17: #{tpu_custom_call.1} parent=1 // pred_fallthru
      _
    // Predicated region
    $region18: #{tpu_custom_call.1} parent=1 // pred_check
      _
    $region19: #{tpu_custom_call.1} parent=1 // pred_check_branch
      %22 = sbr.rel (0) target = $region21
    $region20: #{tpu_custom_call.1} parent=1 // pred_region
      _
    $region21: #{tpu_custom_call.1} parent=1 // pred_fallthru
      _
    // Predicated region
    $region22: #{tpu_custom_call.1} parent=1 // pred_check
      _
    $region23: #{tpu_custom_call.1} parent=1 // pred_check_branch
      %24 = sbr.rel (0) target = $region25
    $region24: #{tpu_custom_call.1} parent=1 // pred_region
      _
    $region25: #{tpu_custom_call.1} parent=1 // pred_fallthru
      _
    // Predicated region
    $region26: #{tpu_custom_call.1} parent=1 // pred_check
      _
    $region27: #{tpu_custom_call.1} parent=1 // pred_check_branch
      %26 = sbr.rel (0) target = $region29
    $region28: #{tpu_custom_call.1} parent=1 // pred_region
      _
    $region29: #{tpu_custom_call.1} parent=1 // pred_fallthru
      _
    %v28 = vld [vmem:[%s0] sm:$0xff]
    %v29 = vlaneseq
    %v30 = vand.u32 %v29, 127
    %v31 = vperm.slane %v28, 0
    %v32 = vlaneseq
    %v33 = vshrl.u32 %v32, 7
    %35 = vset.pattern.permute.xlu0 %v33
    %36 = vperm.xlu0 %35, %v31
    %v37 = vpop.permute.xlu0 %36
    %v38 = vperm.slane %v28, 1
    %v39 = vlaneseq
    %v40 = vshrl.u32 %v39, 7
    %42 = vset.pattern.permute.xlu0 %v40
    %43 = vperm.xlu0 %42, %v38
    %v44 = vpop.permute.xlu0 %43
    %v45 = vperm.slane %v28, 2
    %v46 = vlaneseq
    %v47 = vshrl.u32 %v46, 7
    %49 = vset.pattern.permute.xlu0 %v47
    %50 = vperm.xlu0 %49, %v45
    %v51 = vpop.permute.xlu0 %50
    %v52 = vperm.slane %v28, 3
    %v53 = vlaneseq
    %v54 = vshrl.u32 %v53, 7
    %56 = vset.pattern.permute.xlu0 %v54
    %57 = vperm.xlu0 %56, %v52
    %v58 = vpop.permute.xlu0 %57
    %v59 = vperm.slane %v28, 4
    %v60 = vlaneseq
    %v61 = vshrl.u32 %v60, 7
    %63 = vset.pattern.permute.xlu0 %v61
    %64 = vperm.xlu0 %63, %v59
    %v65 = vpop.permute.xlu0 %64
    %v66 = vperm.slane %v28, 5
    %v67 = vlaneseq
    %v68 = vshrl.u32 %v67, 7
    %70 = vset.pattern.permute.xlu0 %v68
    %71 = vperm.xlu0 %70, %v66
    %v72 = vpop.permute.xlu0 %71
    %v73 = vperm.slane %v28, 6
    %v74 = vlaneseq
    %v75 = vshrl.u32 %v74, 7
    %77 = vset.pattern.permute.xlu0 %v75
    %78 = vperm.xlu0 %77, %v73
    %v79 = vpop.permute.xlu0 %78
    %v80 = vperm.slane %v28, 7
    %v81 = vlaneseq
    %v82 = vshrl.u32 %v81, 7
    %84 = vset.pattern.permute.xlu0 %v82
    %85 = vperm.xlu0 %84, %v80
    %v86 = vpop.permute.xlu0 %85
    %vm87 = vcmp.eq.s32.totalorder %v37, %v30
    %vm88 = vcmp.eq.s32.totalorder %v44, %v30
    %vm89 = vcmp.eq.s32.totalorder %v51, %v30
    %vm90 = vcmp.eq.s32.totalorder %v58, %v30
    %vm91 = vcmp.eq.s32.totalorder %v65, %v30
    %vm92 = vcmp.eq.s32.totalorder %v72, %v30
    %vm93 = vcmp.eq.s32.totalorder %v79, %v30
    %vm94 = vcmp.eq.s32.totalorder %v86, %v30
    %v95 = vsel %vm87, 1.0, 0.0
    %v96 = vsel %vm88, 1.0, 0.0
    %v97 = vsel %vm89, 1.0, 0.0
    %v98 = vsel %vm90, 1.0, 0.0
    %v99 = vsel %vm91, 1.0, 0.0
    %v100 = vsel %vm92, 1.0, 0.0
    %v101 = vsel %vm93, 1.0, 0.0
    %v102 = vsel %vm94, 1.0, 0.0
    %v103 = vpack.c.bf16 %v96, %v95
    %v104 = vpack.c.bf16 %v98, %v97
    %v105 = vpack.c.bf16 %v100, %v99
    %v106 = vpack.c.bf16 %v102, %v101
    %v107 = vld [vmem:[%s1] sm:$0xf]
    %v108 = vld [vmem:[%s1 + $0x4] sm:$0xf]
    %v109 = vld [vmem:[%s1 + $0x8] sm:$0xf]
    %v110 = vld [vmem:[%s1 + $0xc] sm:$0xf]
    %v111 = vld [vmem:[%s1 + $0x10] sm:$0xf]
    %v112 = vld [vmem:[%s1 + $0x14] sm:$0xf]
    %v113 = vld [vmem:[%s1 + $0x18] sm:$0xf]
    %v114 = vld [vmem:[%s1 + $0x1c] sm:$0xf]
    %v115 = vld [vmem:[%s1 + $0x20] sm:$0xf]
    %v116 = vld [vmem:[%s1 + $0x24] sm:$0xf]
    %v117 = vld [vmem:[%s1 + $0x28] sm:$0xf]
    %v118 = vld [vmem:[%s1 + $0x2c] sm:$0xf]
    %v119 = vld [vmem:[%s1 + $0x30] sm:$0x3]
    %v120 = vld [vmem:[%s2] sm:$0x1]
    %v122 = vperm.slane %v120, 0
    %v137 = vunpack.c.l.b16 %v107
    %v138 = vunpack.c.l.b16 %v108
    %v139 = vunpack.c.l.b16 %v109
    %v140 = vunpack.c.l.b16 %v110
    %v141 = vunpack.c.l.b16 %v111
    %v142 = vunpack.c.l.b16 %v112
    %v143 = vunpack.c.l.b16 %v113
    %v144 = vunpack.c.l.b16 %v114
    %v145 = vunpack.c.l.b16 %v115
    %v146 = vunpack.c.l.b16 %v116
    %v147 = vunpack.c.l.b16 %v117
    %v148 = vunpack.c.l.b16 %v118
    %v149 = vunpack.c.l.b16 %v119
    %v150 = vpack.c.b16 %v138, %v137
    %v151 = vpack.c.b16 %v140, %v139
    %v152 = vpack.c.b16 %v142, %v141
    %v153 = vpack.c.b16 %v144, %v143
    %v154 = vpack.c.b16 %v146, %v145
    %v155 = vpack.c.b16 %v148, %v147
    %v156 = vpack.c.b16 %v149, %v149
    %vm163 = vcmask 818176
    %v165 = vsel %vm163, %v103, 0
    %v168 = vsel %vm163, %v104, 0
    %v171 = vsel %vm163, %v105, 0
    %v174 = vsel %vm163, %v106, 0
    %vm176 = vcmask 1041408
    %v178 = vsel %vm176, %v156, 0
    %180 = vmatpush.bf16.msra.mxu0 0
    %181 = vmatpush.bf16.msra.mxu0 %v178
    %182 = vmatpush.bf16.msra.mxu0 %v155
    %183 = vmatpush.bf16.msra.mxu0 %v154
    %184 = vmatpush.bf16.msra.mxu0 %v153
    %185 = vmatpush.bf16.msra.mxu0 %v152
    %186 = vmatpush.bf16.msra.mxu0 %v151
    %187 = vmatpush.bf16.msra.mxu0 %v150
    %188 = vmatmul.bf16.gmra.mxu0 %v165
    %v189 = vpop.f32.mrf.mxu0
    %v190 = vadd.f32 %v122, %v189
    %v191 = vpop.f32.mrf.mxu0
    %v192 = vadd.f32 %v122, %v191
    %193 = vmatmul.bf16.gmra.mxu0 %v168
    %v194 = vpop.f32.mrf.mxu0
    %v195 = vadd.f32 %v122, %v194
    %v196 = vpop.f32.mrf.mxu0
    %v197 = vadd.f32 %v122, %v196
    %198 = vmatmul.bf16.gmra.mxu0 %v171
    %v199 = vpop.f32.mrf.mxu0
    %v200 = vadd.f32 %v122, %v199
    %v201 = vpop.f32.mrf.mxu0
    %v202 = vadd.f32 %v122, %v201
    %203 = vmatmul.bf16.gmra.mxu0 %v174
    %v204 = vpop.f32.mrf.mxu0
    %v205 = vadd.f32 %v122, %v204
    %v206 = vpop.f32.mrf.mxu0
    %v207 = vadd.f32 %v122, %v206
    %208 = vdwg.mxu0
    %v209 = vtanh.pop %v190
    %v210 = vtanh.pop %v192
    %v211 = vtanh.pop %v195
    %v212 = vtanh.pop %v197
    %v213 = vtanh.pop %v200
    %v214 = vtanh.pop %v202
    %v215 = vtanh.pop %v205
    %v216 = vtanh.pop %v207
    %v217 = vpack.c.bf16 %v210, %v209
    %v218 = vpack.c.bf16 %v212, %v211
    %v219 = vpack.c.bf16 %v214, %v213
    %v220 = vpack.c.bf16 %v216, %v215
    %v221 = vld [vmem:[%s3] sm:$0xf]
    %v222 = vld [vmem:[%s3 + $0x4] sm:$0xf]
    %v223 = vld [vmem:[%s3 + $0x8] sm:$0xf]
    %v224 = vld [vmem:[%s3 + $0xc] sm:$0xf]
    %v225 = vld [vmem:[%s4] sm:$0x1]
    %v227 = vperm.slane %v225, 0
    %v233 = vunpack.c.l.b16 %v221
    %v234 = vunpack.c.l.b16 %v222
    %v235 = vunpack.c.l.b16 %v223
    %v236 = vunpack.c.l.b16 %v224
    %v237 = vpack.c.b16 %v234, %v233
    %v238 = vpack.c.b16 %v236, %v235
    %vm241 = vcmask 261120
    %v243 = vsel %vm241, %v217, 0
    %v246 = vsel %vm241, %v218, 0
    %v249 = vsel %vm241, %v219, 0
    %v252 = vsel %vm241, %v220, 0
    %254 = vmatpush.bf16.msra.mxu0 0
    %255 = vmatpush.bf16.msra.mxu0 0
    %256 = vmatpush.bf16.msra.mxu0 0
    %257 = vmatpush.bf16.msra.mxu0 0
    %258 = vmatpush.bf16.msra.mxu0 0
    %259 = vmatpush.bf16.msra.mxu0 0
    %260 = vmatpush.bf16.msra.mxu0 %v238
    %261 = vmatpush.bf16.msra.mxu0 %v237
    %262 = vmatmul.bf16.gmra.mxu0 %v243
    %v263 = vpop.f32.mrf.mxu0
    %v264 = vadd.f32 %v227, %v263
    %v265 = vpop.f32.mrf.mxu0
    %v266 = vadd.f32 %v227, %v265
    %267 = vmatmul.bf16.gmra.mxu0 %v246
    %v268 = vpop.f32.mrf.mxu0
    %v269 = vadd.f32 %v227, %v268
    %v270 = vpop.f32.mrf.mxu0
    %v271 = vadd.f32 %v227, %v270
    %272 = vmatmul.bf16.gmra.mxu0 %v249
    %v273 = vpop.f32.mrf.mxu0
    %v274 = vadd.f32 %v227, %v273
    %v275 = vpop.f32.mrf.mxu0
    %v276 = vadd.f32 %v227, %v275
    %277 = vmatmul.bf16.gmra.mxu0 %v252
    %v278 = vpop.f32.mrf.mxu0
    %v279 = vadd.f32 %v227, %v278
    %v280 = vpop.f32.mrf.mxu0
    %v281 = vadd.f32 %v227, %v280
    %282 = vdwg.mxu0
    %v283 = vtanh.pop %v264
    %v284 = vtanh.pop %v266
    %v285 = vtanh.pop %v269
    %v286 = vtanh.pop %v271
    %v287 = vtanh.pop %v274
    %v288 = vtanh.pop %v276
    %v289 = vtanh.pop %v279
    %v290 = vtanh.pop %v281
    %v291 = vpack.c.bf16 %v284, %v283
    %v292 = vpack.c.bf16 %v286, %v285
    %v293 = vpack.c.bf16 %v288, %v287
    %v294 = vpack.c.bf16 %v290, %v289
    %v295 = vld [vmem:[%s5] sm:$0xf]
    %v296 = vld [vmem:[%s5 + $0x4] sm:$0xf]
    %v297 = vld [vmem:[%s5 + $0x8] sm:$0xf]
    %v298 = vld [vmem:[%s5 + $0xc] sm:$0xf]
    %v299 = vld [vmem:[%s6] sm:$0x1]
    %v301 = vperm.slane %v299, 0
    %v307 = vunpack.c.l.b16 %v295
    %v308 = vunpack.c.l.b16 %v296
    %v309 = vunpack.c.l.b16 %v297
    %v310 = vunpack.c.l.b16 %v298
    %v311 = vpack.c.b16 %v308, %v307
    %v312 = vpack.c.b16 %v310, %v309
    %v316 = vsel %vm241, %v291, 0
    %v319 = vsel %vm241, %v292, 0
    %v322 = vsel %vm241, %v293, 0
    %v325 = vsel %vm241, %v294, 0
    %327 = vmatpush.bf16.msra.mxu0 0
    %328 = vmatpush.bf16.msra.mxu0 0
    %329 = vmatpush.bf16.msra.mxu0 0
    %330 = vmatpush.bf16.msra.mxu0 0
    %331 = vmatpush.bf16.msra.mxu0 0
    %332 = vmatpush.bf16.msra.mxu0 0
    %333 = vmatpush.bf16.msra.mxu0 %v312
    %334 = vmatpush.bf16.msra.mxu0 %v311
    %335 = vmatmul.bf16.gmra.mxu0 %v316
    %v336 = vpop.f32.mrf.mxu0
    %v337 = vadd.f32 %v301, %v336
    %v338 = vpop.f32.mrf.mxu0
    %v339 = vadd.f32 %v301, %v338
    %340 = vmatmul.bf16.gmra.mxu0 %v319
    %v341 = vpop.f32.mrf.mxu0
    %v342 = vadd.f32 %v301, %v341
    %v343 = vpop.f32.mrf.mxu0
    %v344 = vadd.f32 %v301, %v343
    %345 = vmatmul.bf16.gmra.mxu0 %v322
    %v346 = vpop.f32.mrf.mxu0
    %v347 = vadd.f32 %v301, %v346
    %v348 = vpop.f32.mrf.mxu0
    %v349 = vadd.f32 %v301, %v348
    %350 = vmatmul.bf16.gmra.mxu0 %v325
    %v351 = vpop.f32.mrf.mxu0
    %v352 = vadd.f32 %v301, %v351
    %v353 = vpop.f32.mrf.mxu0
    %v354 = vadd.f32 %v301, %v353
    %355 = vdwg.mxu0
    %v356 = vtanh.pop %v337
    %v357 = vtanh.pop %v339
    %v358 = vtanh.pop %v342
    %v359 = vtanh.pop %v344
    %v360 = vtanh.pop %v347
    %v361 = vtanh.pop %v349
    %v362 = vtanh.pop %v352
    %v363 = vtanh.pop %v354
    %v364 = vrot.slane %v356, 4
    %v365 = vadd.f32 %v356, %v364
    %v366 = vrot.slane %v365, 2
    %v367 = vadd.f32 %v365, %v366
    %v368 = vrot.slane %v367, 1
    %v369 = vadd.f32 %v367, %v368
    %v370 = vrot.slane %v357, 4
    %v371 = vadd.f32 %v357, %v370
    %v372 = vrot.slane %v371, 2
    %v373 = vadd.f32 %v371, %v372
    %v374 = vrot.slane %v373, 1
    %v375 = vadd.f32 %v373, %v374
    %v376 = vrot.slane %v358, 4
    %v377 = vadd.f32 %v358, %v376
    %v378 = vrot.slane %v377, 2
    %v379 = vadd.f32 %v377, %v378
    %v380 = vrot.slane %v379, 1
    %v381 = vadd.f32 %v379, %v380
    %v382 = vrot.slane %v359, 4
    %v383 = vadd.f32 %v359, %v382
    %v384 = vrot.slane %v383, 2
    %v385 = vadd.f32 %v383, %v384
    %v386 = vrot.slane %v385, 1
    %v387 = vadd.f32 %v385, %v386
    %v388 = vrot.slane %v360, 4
    %v389 = vadd.f32 %v360, %v388
    %v390 = vrot.slane %v389, 2
    %v391 = vadd.f32 %v389, %v390
    %v392 = vrot.slane %v391, 1
    %v393 = vadd.f32 %v391, %v392
    %v394 = vrot.slane %v361, 4
    %v395 = vadd.f32 %v361, %v394
    %v396 = vrot.slane %v395, 2
    %v397 = vadd.f32 %v395, %v396
    %v398 = vrot.slane %v397, 1
    %v399 = vadd.f32 %v397, %v398
    %v400 = vrot.slane %v362, 4
    %v401 = vadd.f32 %v362, %v400
    %v402 = vrot.slane %v401, 2
    %v403 = vadd.f32 %v401, %v402
    %v404 = vrot.slane %v403, 1
    %v405 = vadd.f32 %v403, %v404
    %v406 = vrot.slane %v363, 4
    %v407 = vadd.f32 %v363, %v406
    %v408 = vrot.slane %v407, 2
    %v409 = vadd.f32 %v407, %v408
    %v410 = vrot.slane %v409, 1
    %v411 = vadd.f32 %v409, %v410
    %vm420 = vcmask 1041409
    %v421 = vsel %vm420, %v375, %v369
    %vm422 = vcmask 1042434
    %v423 = vsel %vm422, %v381, %v421
    %vm424 = vcmask 1043459
    %v425 = vsel %vm424, %v387, %v423
    %vm426 = vcmask 1044484
    %v427 = vsel %vm426, %v393, %v425
    %vm428 = vcmask 1045509
    %v429 = vsel %vm428, %v399, %v427
    %vm430 = vcmask 1046534
    %v431 = vsel %vm430, %v405, %v429
    %vm432 = vcmask 1047559
    %v433 = vsel %vm432, %v411, %v431
    %435 = vst [vmem:[#allocation2] sm:$0xff] %v433
    // Predicated region
    $region30: #{tpu_custom_call.1} parent=1 // pred_check
      _
    $region31: #{tpu_custom_call.1} parent=1 // pred_check_branch
      %437 = sbr.rel (0) target = $region33
    $region32: #{tpu_custom_call.1} parent=1 // pred_region
      %439 = vsyncadd [#allocation3], 0
      %s441 = sshll.u32 [#allocation2], 4
      %s442 = int_to_ptr.vmem [resolvable:$true] %s441
      %s443 = sshll.u32 %s7, 4
      %s444 = int_to_ptr.hbm [resolvable:$true] %s443
      %446 = dma.vmem_to_hbm [thread:$0]  %s442, 128, %s444, [#allocation3]
    $region33: #{tpu_custom_call.1} parent=1 // pred_fallthru
      _
    // Predicated region
    $region34: #{tpu_custom_call.1} parent=1 // pred_check
      _
    $region35: #{tpu_custom_call.1} parent=1 // pred_check_branch
      %448 = sbr.rel (0) target = $region37
    $region36: #{tpu_custom_call.1} parent=1 // pred_region
      %450 = dma.done [#allocation3], 128
    $region37: #{tpu_custom_call.1} parent=1 // pred_fallthru
      _
    %451 = vsyncpa [#allocation3], 1

</llo_original>
